<compile_context>
chip_gen: v6e
topology: v6e:2x2x1
jax: 0.10.0
libtpu: 0.0.40
codegen_flags: <defaults>
</compile_context>

<pallas_src>
import functools

import jax
import jax.numpy as jnp
from jax.experimental import pallas as pl
from jax.experimental.pallas import tpu as pltpu


# ----------------------------------------------------------------------------
# Fused GCNE forward kernel (eval mode: all dropouts are identity).
#   emb_method='embed', embed_edge=False, init reduce='sum', jump_mode=None,
#   nonlinearity='relu', readout='sum', final_readout='sum'.
#
# Ref order:
#   vemb (B*N, P) f32, comb (B*(N+E), B*N) bf16,
#   n_mask (B*N, 1) f32, e_mask (B*E, 1) f32,
#   pool_n (B, B*N) bf16, pool_e (B, B*E) bf16,
#   [w_n (P,P) bf16, b_n (1,P) f32, w_e (P,P) bf16, b_e (1,P) f32] * num_layers,
#   lin1_w (2P, 2*fh) bf16, lin1_b (1, 2*fh) f32,
#   lin2_w (fh, out) bf16,  lin2_b (1, out) f32,
#   out (B, out) f32
# ----------------------------------------------------------------------------
def _gcne_fused_kernel(*refs, num_layers, bn_rows):
    vemb_ref, comb_ref, nm_ref, em_ref, pooln_ref, poole_ref = refs[:6]
    conv_refs = refs[6:6 + 4 * num_layers]
    lin1w_ref, lin1b_ref, lin2w_ref, lin2b_ref, out_ref = refs[6 + 4 * num_layers:]

    BN = bn_rows
    bf16 = jnp.bfloat16

    comb = comb_ref[...]                      # (BN+BE, BN) bf16 block-diag
    nm = nm_ref[...]                          # (BN, 1) f32
    em = em_ref[...]                          # (BE, 1) f32

    # init_conv: node x = embedding (gathered outside), masked.  The edge
    # init-reduce ('sum' of boundary node embeds) falls out of the layer-0
    # aggregation matmul below (reused, not recomputed).
    xn = vemb_ref[...] * nm                   # (BN, P) f32
    xe = None

    # Conv layers: static Python loop; everything stays on-chip between layers.
    for l in range(num_layers):
        wn = conv_refs[4 * l][...]            # (P, P) bf16
        bn = conv_refs[4 * l + 1][...]        # (1, P) f32
        we = conv_refs[4 * l + 2][...]        # (P, P) bf16
        be = conv_refs[4 * l + 3][...]        # (1, P) f32

        # One 2-D matmul does node aggregation (up_adj @ xn) AND edge
        # aggregation (boundary_adj @ xn) for ALL batches at once.
        agg = jnp.dot(comb, xn.astype(bf16),
                      preferred_element_type=jnp.float32)    # (BN+BE, P) f32
        agg_n = agg[:BN, :]                   # (BN, P)
        agg_e = agg[BN:, :]                   # (BE, P)
        if l == 0:
            xe = agg_e                        # InitReduceConv(reduce='sum')

        # Weight matmuls: batch already folded into M; bf16 in, f32 accumulate.
        hn = jnp.dot((agg_n + xn).astype(bf16), wn,
                     preferred_element_type=jnp.float32) + bn
        he = jnp.dot((agg_e + xe).astype(bf16), we,
                     preferred_element_type=jnp.float32) + be

        # relu + re-mask padded rows (cheap VPU work, keeps padding exact).
        xn = jnp.maximum(hn, 0.0) * nm
        xe = jnp.maximum(he, 0.0) * em
        # (layer_drop is identity in eval mode.)

    # readout='sum': masked sum as mask @ dense_x matmuls (matches the
    # reference torch.matmul(x_mask.unsqueeze(1), dense_x)).
    pooled_n = jnp.dot(pooln_ref[...], xn.astype(bf16),
                       preferred_element_type=jnp.float32)   # (B, P)
    pooled_e = jnp.dot(poole_ref[...], xe.astype(bf16),
                       preferred_element_type=jnp.float32)   # (B, P)
    pooled = jnp.concatenate([pooled_n, pooled_e], axis=-1)  # (B, 2P)

    # Head: block-diagonal lin1 (node head -> cols[:fh], edge head -> cols[fh:]),
    # relu, final_readout='sum', then lin2.
    y = jnp.dot(pooled.astype(bf16), lin1w_ref[...],
                preferred_element_type=jnp.float32) + lin1b_ref[...]   # (B, 2fh)
    y = jnp.maximum(y, 0.0)
    fh = y.shape[1] // 2
    x = y[:, :fh] + y[:, fh:]                                          # (B, fh)
    out_ref[...] = (jnp.dot(x.astype(bf16), lin2w_ref[...],
                            preferred_element_type=jnp.float32) + lin2b_ref[...])


# ----------------------------------------------------------------------------
# Wrapper: embedding gather, zero-padding to lane-dense P=128, block-diagonal
# batch folding of the adjacency/incidence and the lin1 heads (all plain JAX
# glue), then a single fused pallas_call.
# ----------------------------------------------------------------------------
def _batch_block_diag(mats):
    """(B, R, C) -> (B*R, B*C) block-diagonal."""
    B, R, C = mats.shape
    eye = jnp.eye(B, dtype=mats.dtype)
    return jnp.einsum('brc,bk->brkc', mats, eye).reshape(B * R, B * C)


def gcne_forward(params, data, feat_pad=128):
    P = feat_pad
    bf16 = jnp.bfloat16

    embed = params["embed"]                                   # (A, De)
    embed_p = jnp.pad(embed, ((0, 0), (0, P - embed.shape[1])))
    v = embed_p[data["atom_idx"]]                             # (B, N, P) gather (glue)

    B, N = data["atom_idx"].shape
    E = data["boundary_adj"].shape[1]
    num_layers = len(params["convs"])
    hidden = params["convs"][0][0].shape[1]
    fh = params["lin2_w"].shape[0]
    out_size = params["lin2_w"].shape[1]

    v2d = v.reshape(B * N, P).astype(jnp.float32)

    # One block-diagonal operand holding [up_adj ; boundary_adj] for all batches.
    up_blk = _batch_block_diag(data["up_adj"])                # (B*N, B*N)
    bd_blk = _batch_block_diag(data["boundary_adj"])          # (B*E, B*N)
    comb2d = jnp.concatenate([up_blk, bd_blk], axis=0).astype(bf16)

    nm_col = data["n_mask"].reshape(B * N, 1).astype(jnp.float32)
    em_col = data["e_mask"].reshape(B * E, 1).astype(jnp.float32)

    # Readout pool matrices (masks on the block diagonal); 0/1 so bf16 is exact.
    pool_n = _batch_block_diag(data["n_mask"][:, None, :]).astype(bf16)  # (B, B*N)
    pool_e = _batch_block_diag(data["e_mask"][:, None, :]).astype(bf16)  # (B, B*E)

    def pad_w(w):  # (din, dout) -> (P, P), zero pad, bf16 for the MXU
        return jnp.pad(w, ((0, P - w.shape[0]), (0, P - w.shape[1]))).astype(bf16)

    def pad_b(b):  # (dout,) -> (1, P), f32 for the VPU add
        return jnp.pad(b, (0, P - b.shape[0])).reshape(1, P).astype(jnp.float32)

    conv_args = []
    for (w_n, b_n, w_e, b_e) in params["convs"]:
        conv_args += [pad_w(w_n), pad_b(b_n), pad_w(w_e), pad_b(b_e)]

    # Block-diagonal lin1: rows [0:hidden] -> node head cols [:fh],
    # rows [P:P+hidden] -> edge head cols [fh:].  No wasted columns.
    w1n, w1e = params["lin1_w"]
    lin1_w = jnp.zeros((2 * P, 2 * fh), jnp.float32)
    lin1_w = lin1_w.at[:hidden, :fh].set(w1n)
    lin1_w = lin1_w.at[P:P + hidden, fh:].set(w1e)
    lin1_w = lin1_w.astype(bf16)
    lin1_b = jnp.concatenate(params["lin1_b"], axis=0).reshape(1, 2 * fh)
    lin2_w = params["lin2_w"].astype(bf16)
    lin2_b = params["lin2_b"].reshape(1, out_size)

    kernel = functools.partial(_gcne_fused_kernel,
                               num_layers=num_layers, bn_rows=B * N)
    # Whole-array VMEM blocks, no grid: one launch, everything on-chip.
    return pl.pallas_call(
        kernel,
        out_shape=jax.ShapeDtypeStruct((B, out_size), jnp.float32),
        compiler_params=pltpu.CompilerParams(
            vmem_limit_bytes=32 * 1024 * 1024),
    )(v2d, comb2d, nm_col, em_col, pool_n, pool_e, *conv_args,
      lin1_w, lin1_b, lin2_w, lin2_b)


# ----------------------------------------------------------------------------
# Deterministic parameter / input construction.
# ----------------------------------------------------------------------------
def make_params(key, atom_types, embed_dim, hidden, num_layers, out_size,
                final_hidden_multiplier):
    keys = jax.random.split(key, 4 + 4 * num_layers)
    params = {}
    params["embed"] = 0.1 * jax.random.normal(keys[0], (atom_types, embed_dim),
                                              jnp.float32)
    convs = []
    for i in range(num_layers):
        layer_dim = embed_dim if i == 0 else hidden
        k0, k1 = keys[4 + 4 * i], keys[5 + 4 * i]
        w_n = 0.1 * jax.random.normal(k0, (layer_dim, hidden), jnp.float32)
        b_n = jnp.zeros((hidden,), jnp.float32)
        w_e = 0.1 * jax.random.normal(k1, (layer_dim, hidden), jnp.float32)
        b_e = jnp.zeros((hidden,), jnp.float32)
        convs.append((w_n, b_n, w_e, b_e))
    params["convs"] = convs
    fh = final_hidden_multiplier * hidden
    params["lin1_w"] = [0.1 * jax.random.normal(keys[1], (hidden, fh), jnp.float32),
                        0.1 * jax.random.normal(keys[2], (hidden, fh), jnp.float32)]
    params["lin1_b"] = [jnp.zeros((fh,), jnp.float32),
                        jnp.zeros((fh,), jnp.float32)]
    params["lin2_w"] = 0.1 * jax.random.normal(keys[3], (fh, out_size), jnp.float32)
    params["lin2_b"] = jnp.zeros((out_size,), jnp.float32)
    return params


def make_data(key, B, N, E, atom_types):
    k1, k2, k3, k4 = jax.random.split(key, 4)
    n_counts = jnp.array([12, 16], jnp.int32)
    e_counts = jnp.array([10, 16], jnp.int32)
    n_mask = (jnp.arange(N)[None, :] < n_counts[:, None]).astype(jnp.float32)
    e_mask = (jnp.arange(E)[None, :] < e_counts[:, None]).astype(jnp.float32)

    atom_idx = jax.random.randint(k1, (B, N), 0, atom_types)

    # node-node adjacency (symmetric, masked to valid nodes, no self loops)
    adj = (jax.random.uniform(k2, (B, N, N)) < 0.25).astype(jnp.float32)
    adj = jnp.maximum(adj, jnp.transpose(adj, (0, 2, 1)))
    adj = adj * n_mask[:, :, None] * n_mask[:, None, :]
    adj = adj * (1.0 - jnp.eye(N)[None])

    # edge-node incidence: each valid edge touches (up to) two valid nodes
    src = jax.random.randint(k3, (B, E), 0, N) % n_counts[:, None]
    dst = jax.random.randint(k4, (B, E), 0, N) % n_counts[:, None]
    boundary = jnp.minimum(jax.nn.one_hot(src, N) + jax.nn.one_hot(dst, N), 1.0)
    boundary = boundary * e_mask[:, :, None]

    return {"atom_idx": atom_idx, "n_mask": n_mask, "e_mask": e_mask,
            "up_adj": adj, "boundary_adj": boundary}


if __name__ == "__main__":
    B, N, E = 2, 16, 16
    atom_types, embed_dim, hidden = 8, 32, 32
    num_layers, out_size, final_hidden_multiplier = 2, 4, 2

    key = jax.random.PRNGKey(0)
    kp, kd = jax.random.split(key)
    params = make_params(kp, atom_types, embed_dim, hidden, num_layers,
                         out_size, final_hidden_multiplier)
    data = make_data(kd, B, N, E, atom_types)

    out = gcne_forward(params, data)
    out = jax.block_until_ready(out)
    assert out.shape == (B, out_size) and out.dtype == jnp.float32
    print("KERNEL_OK")
</pallas_src>

<mosaic_0001>
module attributes {stable_mosaic.version = 11 : i64} {
  func.func @_gcne_fused_kernel(%arg0: memref<32x128xf32, #tpu.memory_space<vmem>>, %arg1: memref<64x32xbf16, #tpu.memory_space<vmem>>, %arg2: memref<32x1xf32, #tpu.memory_space<vmem>>, %arg3: memref<32x1xf32, #tpu.memory_space<vmem>>, %arg4: memref<2x32xbf16, #tpu.memory_space<vmem>>, %arg5: memref<2x32xbf16, #tpu.memory_space<vmem>>, %arg6: memref<128x128xbf16, #tpu.memory_space<vmem>>, %arg7: memref<1x128xf32, #tpu.memory_space<vmem>>, %arg8: memref<128x128xbf16, #tpu.memory_space<vmem>>, %arg9: memref<1x128xf32, #tpu.memory_space<vmem>>, %arg10: memref<128x128xbf16, #tpu.memory_space<vmem>>, %arg11: memref<1x128xf32, #tpu.memory_space<vmem>>, %arg12: memref<128x128xbf16, #tpu.memory_space<vmem>>, %arg13: memref<1x128xf32, #tpu.memory_space<vmem>>, %arg14: memref<256x128xbf16, #tpu.memory_space<vmem>>, %arg15: memref<1x128xf32, #tpu.memory_space<vmem>>, %arg16: memref<64x4xbf16, #tpu.memory_space<vmem>>, %arg17: memref<1x4xf32, #tpu.memory_space<vmem>>, %arg18: memref<2x4xf32, #tpu.memory_space<vmem>>) attributes {dimension_semantics = [], scalar_prefetch = 0 : i64, scratch_operands = 0 : i64, tpu.core_type = #tpu.core_type<tc>} {
    %c0 = arith.constant 0 : index
    %c0_0 = arith.constant 0 : index
    %0 = vector.load %arg1[%c0, %c0_0] : memref<64x32xbf16, #tpu.memory_space<vmem>>, vector<64x32xbf16>
    %c0_1 = arith.constant 0 : index
    %c0_2 = arith.constant 0 : index
    %1 = vector.load %arg2[%c0_1, %c0_2] : memref<32x1xf32, #tpu.memory_space<vmem>>, vector<32x1xf32>
    %c0_3 = arith.constant 0 : index
    %c0_4 = arith.constant 0 : index
    %2 = vector.load %arg3[%c0_3, %c0_4] : memref<32x1xf32, #tpu.memory_space<vmem>>, vector<32x1xf32>
    %c0_5 = arith.constant 0 : index
    %c0_6 = arith.constant 0 : index
    %3 = vector.load %arg0[%c0_5, %c0_6] : memref<32x128xf32, #tpu.memory_space<vmem>>, vector<32x128xf32>
    %4 = vector.broadcast %1 : vector<32x1xf32> to vector<32x128xf32>
    %5 = arith.mulf %3, %4 : vector<32x128xf32>
    %c0_7 = arith.constant 0 : index
    %c0_8 = arith.constant 0 : index
    %6 = vector.load %arg6[%c0_7, %c0_8] : memref<128x128xbf16, #tpu.memory_space<vmem>>, vector<128x128xbf16>
    %c0_9 = arith.constant 0 : index
    %c0_10 = arith.constant 0 : index
    %7 = vector.load %arg7[%c0_9, %c0_10] : memref<1x128xf32, #tpu.memory_space<vmem>>, vector<1x128xf32>
    %c0_11 = arith.constant 0 : index
    %c0_12 = arith.constant 0 : index
    %8 = vector.load %arg8[%c0_11, %c0_12] : memref<128x128xbf16, #tpu.memory_space<vmem>>, vector<128x128xbf16>
    %c0_13 = arith.constant 0 : index
    %c0_14 = arith.constant 0 : index
    %9 = vector.load %arg9[%c0_13, %c0_14] : memref<1x128xf32, #tpu.memory_space<vmem>>, vector<1x128xf32>
    %10 = arith.truncf %5 : vector<32x128xf32> to vector<32x128xbf16>
    %cst = arith.constant dense<0.000000e+00> : vector<64x128xf32>
    %11 = tpu.matmul %0, %10, %cst {dimension_numbers = #tpu.dot_dimension_numbers<[1], [0], [0], [1], [0, 0, 1, 1], [], []>} : vector<64x32xbf16>, vector<32x128xbf16>, vector<64x128xf32> -> vector<64x128xf32>
    %12 = vector.extract_strided_slice %11 {offsets = [0, 0], sizes = [32, 128], strides = [1, 1]} : vector<64x128xf32> to vector<32x128xf32>
    %13 = vector.extract_strided_slice %11 {offsets = [32, 0], sizes = [32, 128], strides = [1, 1]} : vector<64x128xf32> to vector<32x128xf32>
    %14 = arith.addf %12, %5 : vector<32x128xf32>
    %15 = arith.truncf %14 : vector<32x128xf32> to vector<32x128xbf16>
    %cst_15 = arith.constant dense<0.000000e+00> : vector<32x128xf32>
    %16 = tpu.matmul %15, %6, %cst_15 {dimension_numbers = #tpu.dot_dimension_numbers<[1], [0], [0], [1], [0, 0, 1, 1], [], []>} : vector<32x128xbf16>, vector<128x128xbf16>, vector<32x128xf32> -> vector<32x128xf32>
    %17 = vector.broadcast %7 : vector<1x128xf32> to vector<32x128xf32>
    %18 = arith.addf %16, %17 : vector<32x128xf32>
    %19 = arith.addf %13, %13 : vector<32x128xf32>
    %20 = arith.truncf %19 : vector<32x128xf32> to vector<32x128xbf16>
    %cst_16 = arith.constant dense<0.000000e+00> : vector<32x128xf32>
    %21 = tpu.matmul %20, %8, %cst_16 {dimension_numbers = #tpu.dot_dimension_numbers<[1], [0], [0], [1], [0, 0, 1, 1], [], []>} : vector<32x128xbf16>, vector<128x128xbf16>, vector<32x128xf32> -> vector<32x128xf32>
    %22 = vector.broadcast %9 : vector<1x128xf32> to vector<32x128xf32>
    %23 = arith.addf %21, %22 : vector<32x128xf32>
    %cst_17 = arith.constant 0.000000e+00 : f32
    %24 = vector.broadcast %cst_17 : f32 to vector<32x128xf32>
    %25 = arith.maximumf %18, %24 : vector<32x128xf32>
    %26 = vector.broadcast %1 : vector<32x1xf32> to vector<32x128xf32>
    %27 = arith.mulf %25, %26 : vector<32x128xf32>
    %cst_18 = arith.constant 0.000000e+00 : f32
    %28 = vector.broadcast %cst_18 : f32 to vector<32x128xf32>
    %29 = arith.maximumf %23, %28 : vector<32x128xf32>
    %30 = vector.broadcast %2 : vector<32x1xf32> to vector<32x128xf32>
    %31 = arith.mulf %29, %30 : vector<32x128xf32>
    %c0_19 = arith.constant 0 : index
    %c0_20 = arith.constant 0 : index
    %32 = vector.load %arg10[%c0_19, %c0_20] : memref<128x128xbf16, #tpu.memory_space<vmem>>, vector<128x128xbf16>
    %c0_21 = arith.constant 0 : index
    %c0_22 = arith.constant 0 : index
    %33 = vector.load %arg11[%c0_21, %c0_22] : memref<1x128xf32, #tpu.memory_space<vmem>>, vector<1x128xf32>
    %c0_23 = arith.constant 0 : index
    %c0_24 = arith.constant 0 : index
    %34 = vector.load %arg12[%c0_23, %c0_24] : memref<128x128xbf16, #tpu.memory_space<vmem>>, vector<128x128xbf16>
    %c0_25 = arith.constant 0 : index
    %c0_26 = arith.constant 0 : index
    %35 = vector.load %arg13[%c0_25, %c0_26] : memref<1x128xf32, #tpu.memory_space<vmem>>, vector<1x128xf32>
    %36 = arith.truncf %27 : vector<32x128xf32> to vector<32x128xbf16>
    %cst_27 = arith.constant dense<0.000000e+00> : vector<64x128xf32>
    %37 = tpu.matmul %0, %36, %cst_27 {dimension_numbers = #tpu.dot_dimension_numbers<[1], [0], [0], [1], [0, 0, 1, 1], [], []>} : vector<64x32xbf16>, vector<32x128xbf16>, vector<64x128xf32> -> vector<64x128xf32>
    %38 = vector.extract_strided_slice %37 {offsets = [0, 0], sizes = [32, 128], strides = [1, 1]} : vector<64x128xf32> to vector<32x128xf32>
    %39 = vector.extract_strided_slice %37 {offsets = [32, 0], sizes = [32, 128], strides = [1, 1]} : vector<64x128xf32> to vector<32x128xf32>
    %40 = arith.addf %38, %27 : vector<32x128xf32>
    %41 = arith.truncf %40 : vector<32x128xf32> to vector<32x128xbf16>
    %cst_28 = arith.constant dense<0.000000e+00> : vector<32x128xf32>
    %42 = tpu.matmul %41, %32, %cst_28 {dimension_numbers = #tpu.dot_dimension_numbers<[1], [0], [0], [1], [0, 0, 1, 1], [], []>} : vector<32x128xbf16>, vector<128x128xbf16>, vector<32x128xf32> -> vector<32x128xf32>
    %43 = vector.broadcast %33 : vector<1x128xf32> to vector<32x128xf32>
    %44 = arith.addf %42, %43 : vector<32x128xf32>
    %45 = arith.addf %39, %31 : vector<32x128xf32>
    %46 = arith.truncf %45 : vector<32x128xf32> to vector<32x128xbf16>
    %cst_29 = arith.constant dense<0.000000e+00> : vector<32x128xf32>
    %47 = tpu.matmul %46, %34, %cst_29 {dimension_numbers = #tpu.dot_dimension_numbers<[1], [0], [0], [1], [0, 0, 1, 1], [], []>} : vector<32x128xbf16>, vector<128x128xbf16>, vector<32x128xf32> -> vector<32x128xf32>
    %48 = vector.broadcast %35 : vector<1x128xf32> to vector<32x128xf32>
    %49 = arith.addf %47, %48 : vector<32x128xf32>
    %cst_30 = arith.constant 0.000000e+00 : f32
    %50 = vector.broadcast %cst_30 : f32 to vector<32x128xf32>
    %51 = arith.maximumf %44, %50 : vector<32x128xf32>
    %52 = vector.broadcast %1 : vector<32x1xf32> to vector<32x128xf32>
    %53 = arith.mulf %51, %52 : vector<32x128xf32>
    %cst_31 = arith.constant 0.000000e+00 : f32
    %54 = vector.broadcast %cst_31 : f32 to vector<32x128xf32>
    %55 = arith.maximumf %49, %54 : vector<32x128xf32>
    %56 = vector.broadcast %2 : vector<32x1xf32> to vector<32x128xf32>
    %57 = arith.mulf %55, %56 : vector<32x128xf32>
    %c0_32 = arith.constant 0 : index
    %c0_33 = arith.constant 0 : index
    %58 = vector.load %arg4[%c0_32, %c0_33] : memref<2x32xbf16, #tpu.memory_space<vmem>>, vector<2x32xbf16>
    %59 = arith.truncf %53 : vector<32x128xf32> to vector<32x128xbf16>
    %cst_34 = arith.constant dense<0.000000e+00> : vector<2x128xf32>
    %60 = tpu.matmul %58, %59, %cst_34 {dimension_numbers = #tpu.dot_dimension_numbers<[1], [0], [0], [1], [0, 0, 1, 1], [], []>} : vector<2x32xbf16>, vector<32x128xbf16>, vector<2x128xf32> -> vector<2x128xf32>
    %c0_35 = arith.constant 0 : index
    %c0_36 = arith.constant 0 : index
    %61 = vector.load %arg5[%c0_35, %c0_36] : memref<2x32xbf16, #tpu.memory_space<vmem>>, vector<2x32xbf16>
    %62 = arith.truncf %57 : vector<32x128xf32> to vector<32x128xbf16>
    %cst_37 = arith.constant dense<0.000000e+00> : vector<2x128xf32>
    %63 = tpu.matmul %61, %62, %cst_37 {dimension_numbers = #tpu.dot_dimension_numbers<[1], [0], [0], [1], [0, 0, 1, 1], [], []>} : vector<2x32xbf16>, vector<32x128xbf16>, vector<2x128xf32> -> vector<2x128xf32>
    %64 = tpu.concatenate %60, %63 in 1 : vector<2x128xf32>, vector<2x128xf32> -> vector<2x256xf32>
    %65 = arith.truncf %64 : vector<2x256xf32> to vector<2x256xbf16>
    %c0_38 = arith.constant 0 : index
    %c0_39 = arith.constant 0 : index
    %66 = vector.load %arg14[%c0_38, %c0_39] : memref<256x128xbf16, #tpu.memory_space<vmem>>, vector<256x128xbf16>
    %cst_40 = arith.constant dense<0.000000e+00> : vector<2x128xf32>
    %67 = tpu.matmul %65, %66, %cst_40 {dimension_numbers = #tpu.dot_dimension_numbers<[1], [0], [0], [1], [0, 0, 1, 1], [], []>} : vector<2x256xbf16>, vector<256x128xbf16>, vector<2x128xf32> -> vector<2x128xf32>
    %c0_41 = arith.constant 0 : index
    %c0_42 = arith.constant 0 : index
    %68 = vector.load %arg15[%c0_41, %c0_42] : memref<1x128xf32, #tpu.memory_space<vmem>>, vector<1x128xf32>
    %69 = vector.broadcast %68 : vector<1x128xf32> to vector<2x128xf32>
    %70 = arith.addf %67, %69 : vector<2x128xf32>
    %cst_43 = arith.constant 0.000000e+00 : f32
    %71 = vector.broadcast %cst_43 : f32 to vector<2x128xf32>
    %72 = arith.maximumf %70, %71 : vector<2x128xf32>
    %73 = vector.extract_strided_slice %72 {offsets = [0, 0], sizes = [2, 64], strides = [1, 1]} : vector<2x128xf32> to vector<2x64xf32>
    %74 = vector.extract_strided_slice %72 {offsets = [0, 64], sizes = [2, 64], strides = [1, 1]} : vector<2x128xf32> to vector<2x64xf32>
    %75 = arith.addf %73, %74 : vector<2x64xf32>
    %76 = arith.truncf %75 : vector<2x64xf32> to vector<2x64xbf16>
    %c0_44 = arith.constant 0 : index
    %c0_45 = arith.constant 0 : index
    %77 = vector.load %arg16[%c0_44, %c0_45] : memref<64x4xbf16, #tpu.memory_space<vmem>>, vector<64x4xbf16>
    %cst_46 = arith.constant dense<0.000000e+00> : vector<2x4xf32>
    %78 = tpu.matmul %76, %77, %cst_46 {dimension_numbers = #tpu.dot_dimension_numbers<[1], [0], [0], [1], [0, 0, 1, 1], [], []>} : vector<2x64xbf16>, vector<64x4xbf16>, vector<2x4xf32> -> vector<2x4xf32>
    %c0_47 = arith.constant 0 : index
    %c0_48 = arith.constant 0 : index
    %79 = vector.load %arg17[%c0_47, %c0_48] : memref<1x4xf32, #tpu.memory_space<vmem>>, vector<1x4xf32>
    %80 = vector.broadcast %79 : vector<1x4xf32> to vector<2x4xf32>
    %81 = arith.addf %78, %80 : vector<2x4xf32>
    %c0_49 = arith.constant 0 : index
    %c0_50 = arith.constant 0 : index
    %82 = vector.load %arg18[%c0_49, %c0_50] : memref<2x4xf32, #tpu.memory_space<vmem>>, vector<2x4xf32>
    tpu.vector_store %arg18[%c0_49, %c0_50], %81 {strides = array<i32>} : memref<2x4xf32, #tpu.memory_space<vmem>>, vector<2x4xf32>,
    return
  }
}

</mosaic_0001>

<llo_original>
// kernel: tpu_custom_call.1
$region0: #{tpu_custom_call.1}
  #allocation0 [shape = 'u32[]', space=smem, size = 0x4, offset = 0x4, fixed_abs, tag = 'smem constant byte address 0x4 - core index']
  #allocation1 [shape = 'u32[144,128]{1,0:T(1,128)}', space=vmem, size = 0x12000, scoped, tag = 'internal scratch']
  %s0 = inlined_call_operand.vmem [shape: f32[32,128], index: 0, kind: input, shape index: {}]
  %s1 = inlined_call_operand.vmem [shape: bf16[64,32], index: 1, kind: input, shape index: {}]
  %s2 = inlined_call_operand.vmem [shape: f32[32,1], index: 2, kind: input, shape index: {}]
  %s3 = inlined_call_operand.vmem [shape: f32[32,1], index: 3, kind: input, shape index: {}]
  %s4 = inlined_call_operand.vmem [shape: bf16[2,32], index: 4, kind: input, shape index: {}]
  %s5 = inlined_call_operand.vmem [shape: bf16[2,32], index: 5, kind: input, shape index: {}]
  %s6 = inlined_call_operand.hbm [shape: bf16[128,128], index: 6, kind: input, shape index: {}]
  %s7 = inlined_call_operand.vmem [shape: f32[1,128], index: 7, kind: input, shape index: {}]
  %s8 = inlined_call_operand.hbm [shape: bf16[128,128], index: 8, kind: input, shape index: {}]
  %s9 = inlined_call_operand.vmem [shape: f32[1,128], index: 9, kind: input, shape index: {}]
  %s10 = inlined_call_operand.hbm [shape: bf16[128,128], index: 10, kind: input, shape index: {}]
  %s11 = inlined_call_operand.vmem [shape: f32[1,128], index: 11, kind: input, shape index: {}]
  %s12 = inlined_call_operand.hbm [shape: bf16[128,128], index: 12, kind: input, shape index: {}]
  %s13 = inlined_call_operand.vmem [shape: f32[1,128], index: 13, kind: input, shape index: {}]
  %s14 = inlined_call_operand.vmem [shape: bf16[256,128], index: 14, kind: input, shape index: {}]
  %s15 = inlined_call_operand.vmem [shape: f32[1,128], index: 15, kind: input, shape index: {}]
  %s16 = inlined_call_operand.vmem [shape: bf16[64,4], index: 16, kind: input, shape index: {}]
  %s17 = inlined_call_operand.vmem [shape: f32[1,4], index: 17, kind: input, shape index: {}]
  %s18 = inlined_call_operand.hbm [shape: f32[2,4], index: 18, kind: output, shape index: {}]
  %s19 = sld [smem:[#allocation0]]
  $region98: #{tpu_custom_call.1} parent=0
    _
  %s21 = ssub.s32 1, %s19
  %s22 = scalar_select 0, %s21, %s19
  $region1: #{tpu_custom_call.1} parent=0
    #allocation2 [shape = 'u8[32768]{0}', space=vmem, size = 0x8000, scoped, tag = 'input window, operand 6, single buffered']
    #allocation3 [shape = 's32[1]{0}', space=sflag, size = 0x4, scoped, tag = 'scoped memory for tpu_custom_call.1']
    #allocation4 [shape = 's32[1]{0}', space=sflag, size = 0x4, scoped, tag = 'scoped memory for tpu_custom_call.1']
    #allocation5 [shape = 'u8[32768]{0}', space=vmem, size = 0x8000, scoped, tag = 'input window, operand 8, single buffered']
    #allocation6 [shape = 's32[1]{0}', space=sflag, size = 0x4, scoped, tag = 'scoped memory for tpu_custom_call.1']
    #allocation7 [shape = 'u8[32768]{0}', space=vmem, size = 0x8000, scoped, tag = 'input window, operand 10, single buffered']
    #allocation8 [shape = 'u8[32768]{0}', space=vmem, size = 0x8000, scoped, tag = 'input window, operand 12, single buffered']
    #allocation9 [shape = 's32[1]{0}', space=sflag, size = 0x4, scoped, tag = 'scoped memory for tpu_custom_call.1']
    #allocation10 [shape = 'u8[1024]{0}', space=vmem, size = 0x400, scoped, tag = 'output window, operand 0, single buffered']
    %23 = vsyncpa [#allocation3], 0
    %24 = vsyncpa [#allocation6], 0
    %25 = vsyncpa [#allocation9], 0
    %26 = vsyncpa [#allocation4], 0
    // Predicated region
    $region2: #{tpu_custom_call.1} parent=1 // pred_check
      _
    $region3: #{tpu_custom_call.1} parent=1 // pred_check_branch
      %28 = sbr.rel (0) target = $region5
    $region4: #{tpu_custom_call.1} parent=1 // pred_region
      _
    $region5: #{tpu_custom_call.1} parent=1 // pred_fallthru
      _
    // Predicated region
    $region6: #{tpu_custom_call.1} parent=1 // pred_check
      _
    $region7: #{tpu_custom_call.1} parent=1 // pred_check_branch
      %30 = sbr.rel (0) target = $region9
    $region8: #{tpu_custom_call.1} parent=1 // pred_region
      _
    $region9: #{tpu_custom_call.1} parent=1 // pred_fallthru
      _
    // Predicated region
    $region10: #{tpu_custom_call.1} parent=1 // pred_check
      _
    $region11: #{tpu_custom_call.1} parent=1 // pred_check_branch
      %32 = sbr.rel (0) target = $region13
    $region12: #{tpu_custom_call.1} parent=1 // pred_region
      _
    $region13: #{tpu_custom_call.1} parent=1 // pred_fallthru
      _
    // Predicated region
    $region14: #{tpu_custom_call.1} parent=1 // pred_check
      _
    $region15: #{tpu_custom_call.1} parent=1 // pred_check_branch
      %34 = sbr.rel (0) target = $region17
    $region16: #{tpu_custom_call.1} parent=1 // pred_region
      _
    $region17: #{tpu_custom_call.1} parent=1 // pred_fallthru
      _
    // Predicated region
    $region18: #{tpu_custom_call.1} parent=1 // pred_check
      _
    $region19: #{tpu_custom_call.1} parent=1 // pred_check_branch
      %36 = sbr.rel (0) target = $region21
    $region20: #{tpu_custom_call.1} parent=1 // pred_region
      _
    $region21: #{tpu_custom_call.1} parent=1 // pred_fallthru
      _
    // Predicated region
    $region22: #{tpu_custom_call.1} parent=1 // pred_check
      _
    $region23: #{tpu_custom_call.1} parent=1 // pred_check_branch
      %38 = sbr.rel (0) target = $region25
    $region24: #{tpu_custom_call.1} parent=1 // pred_region
      _
    $region25: #{tpu_custom_call.1} parent=1 // pred_fallthru
      _
    // Predicated region
    $region26: #{tpu_custom_call.1} parent=1 // pred_check
      _
    $region27: #{tpu_custom_call.1} parent=1 // pred_check_branch
      %40 = sbr.rel (0) target = $region29
    $region28: #{tpu_custom_call.1} parent=1 // pred_region
      %s42 = ssub.s32 1024, 1024
      %43 = vsyncadd [#allocation3], %s42
      %s44 = sshll.u32 [#allocation2], 4
      %s45 = int_to_ptr.vmem [resolvable:$true] %s44
      %50 = dma.hbm_to_vmem [thread:$0]  %s6, 1024, %s45, [#allocation3], 64, 64, 4
    $region29: #{tpu_custom_call.1} parent=1 // pred_fallthru
      _
    // Predicated region
    $region30: #{tpu_custom_call.1} parent=1 // pred_check
      _
    $region31: #{tpu_custom_call.1} parent=1 // pred_check_branch
      %52 = sbr.rel (0) target = $region33
    $region32: #{tpu_custom_call.1} parent=1 // pred_region
      _
    $region33: #{tpu_custom_call.1} parent=1 // pred_fallthru
      _
    // Predicated region
    $region34: #{tpu_custom_call.1} parent=1 // pred_check
      _
    $region35: #{tpu_custom_call.1} parent=1 // pred_check_branch
      %54 = sbr.rel (0) target = $region37
    $region36: #{tpu_custom_call.1} parent=1 // pred_region
      %s56 = ssub.s32 1024, 1024
      %57 = vsyncadd [#allocation6], %s56
      %s58 = sshll.u32 [#allocation5], 4
      %s59 = int_to_ptr.vmem [resolvable:$true] %s58
      %64 = dma.hbm_to_vmem [thread:$0]  %s8, 1024, %s59, [#allocation6], 64, 64, 4
    $region37: #{tpu_custom_call.1} parent=1 // pred_fallthru
      _
    // Predicated region
    $region38: #{tpu_custom_call.1} parent=1 // pred_check
      _
    $region39: #{tpu_custom_call.1} parent=1 // pred_check_branch
      %66 = sbr.rel (0) target = $region41
    $region40: #{tpu_custom_call.1} parent=1 // pred_region
      _
    $region41: #{tpu_custom_call.1} parent=1 // pred_fallthru
      _
    // Predicated region
    $region42: #{tpu_custom_call.1} parent=1 // pred_check
      _
    $region43: #{tpu_custom_call.1} parent=1 // pred_check_branch
      %68 = sbr.rel (0) target = $region45
    $region44: #{tpu_custom_call.1} parent=1 // pred_region
      %s70 = ssub.s32 1024, 1024
      %71 = vsyncadd [#allocation6], %s70
      %s72 = sshll.u32 [#allocation7], 4
      %s73 = int_to_ptr.vmem [resolvable:$true] %s72
      %78 = dma.hbm_to_vmem [thread:$0]  %s10, 1024, %s73, [#allocation6], 64, 64, 4
    $region45: #{tpu_custom_call.1} parent=1 // pred_fallthru
      _
    // Predicated region
    $region46: #{tpu_custom_call.1} parent=1 // pred_check
      _
    $region47: #{tpu_custom_call.1} parent=1 // pred_check_branch
      %80 = sbr.rel (0) target = $region49
    $region48: #{tpu_custom_call.1} parent=1 // pred_region
      _
    $region49: #{tpu_custom_call.1} parent=1 // pred_fallthru
      _
    // Predicated region
    $region50: #{tpu_custom_call.1} parent=1 // pred_check
      _
    $region51: #{tpu_custom_call.1} parent=1 // pred_check_branch
      %82 = sbr.rel (0) target = $region53
    $region52: #{tpu_custom_call.1} parent=1 // pred_region
      %s84 = ssub.s32 1024, 1024
      %85 = vsyncadd [#allocation9], %s84
      %s86 = sshll.u32 [#allocation8], 4
      %s87 = int_to_ptr.vmem [resolvable:$true] %s86
      %92 = dma.hbm_to_vmem [thread:$0]  %s12, 1024, %s87, [#allocation9], 64, 64, 4
    $region53: #{tpu_custom_call.1} parent=1 // pred_fallthru
      _
    // Predicated region
    $region54: #{tpu_custom_call.1} parent=1 // pred_check
      _
    $region55: #{tpu_custom_call.1} parent=1 // pred_check_branch
      %94 = sbr.rel (0) target = $region57
    $region56: #{tpu_custom_call.1} parent=1 // pred_region
      _
    $region57: #{tpu_custom_call.1} parent=1 // pred_fallthru
      _
    // Predicated region
    $region58: #{tpu_custom_call.1} parent=1 // pred_check
      _
    $region59: #{tpu_custom_call.1} parent=1 // pred_check_branch
      %96 = sbr.rel (0) target = $region61
    $region60: #{tpu_custom_call.1} parent=1 // pred_region
      _
    $region61: #{tpu_custom_call.1} parent=1 // pred_fallthru
      _
    // Predicated region
    $region62: #{tpu_custom_call.1} parent=1 // pred_check
      _
    $region63: #{tpu_custom_call.1} parent=1 // pred_check_branch
      %98 = sbr.rel (0) target = $region65
    $region64: #{tpu_custom_call.1} parent=1 // pred_region
      _
    $region65: #{tpu_custom_call.1} parent=1 // pred_fallthru
      _
    // Predicated region
    $region66: #{tpu_custom_call.1} parent=1 // pred_check
      _
    $region67: #{tpu_custom_call.1} parent=1 // pred_check_branch
      %100 = sbr.rel (0) target = $region69
    $region68: #{tpu_custom_call.1} parent=1 // pred_region
      _
    $region69: #{tpu_custom_call.1} parent=1 // pred_fallthru
      _
    // Predicated region
    $region70: #{tpu_custom_call.1} parent=1 // pred_check
      _
    $region71: #{tpu_custom_call.1} parent=1 // pred_check_branch
      %102 = sbr.rel (0) target = $region73
    $region72: #{tpu_custom_call.1} parent=1 // pred_region
      _
    $region73: #{tpu_custom_call.1} parent=1 // pred_fallthru
      _
    // Predicated region
    $region74: #{tpu_custom_call.1} parent=1 // pred_check
      _
    $region75: #{tpu_custom_call.1} parent=1 // pred_check_branch
      %104 = sbr.rel (0) target = $region77
    $region76: #{tpu_custom_call.1} parent=1 // pred_region
      %105 = dma.done [#allocation3], 1024
    $region77: #{tpu_custom_call.1} parent=1 // pred_fallthru
      _
    // Predicated region
    $region78: #{tpu_custom_call.1} parent=1 // pred_check
      _
    $region79: #{tpu_custom_call.1} parent=1 // pred_check_branch
      %107 = sbr.rel (0) target = $region81
    $region80: #{tpu_custom_call.1} parent=1 // pred_region
      %108 = dma.done [#allocation6], 1024
    $region81: #{tpu_custom_call.1} parent=1 // pred_fallthru
      _
    // Predicated region
    $region82: #{tpu_custom_call.1} parent=1 // pred_check
      _
    $region83: #{tpu_custom_call.1} parent=1 // pred_check_branch
      %110 = sbr.rel (0) target = $region85
    $region84: #{tpu_custom_call.1} parent=1 // pred_region
      %111 = dma.done [#allocation6], 1024
    $region85: #{tpu_custom_call.1} parent=1 // pred_fallthru
      _
    // Predicated region
    $region86: #{tpu_custom_call.1} parent=1 // pred_check
      _
    $region87: #{tpu_custom_call.1} parent=1 // pred_check_branch
      %113 = sbr.rel (0) target = $region89
    $region88: #{tpu_custom_call.1} parent=1 // pred_region
      %114 = dma.done [#allocation9], 1024
    $region89: #{tpu_custom_call.1} parent=1 // pred_fallthru
      _
    %v116 = vld [vmem:[%s1] sm:$0xf]
    %v117 = vld [vmem:[%s1 + $0x4] sm:$0xf]
    %v118 = vld [vmem:[%s1 + $0x8] sm:$0xf]
    %v119 = vld [vmem:[%s1 + $0xc] sm:$0xf]
    %v120 = vld [vmem:[%s1 + $0x10] sm:$0xf]
    %v121 = vld [vmem:[%s1 + $0x14] sm:$0xf]
    %v122 = vld [vmem:[%s1 + $0x18] sm:$0xf]
    %v123 = vld [vmem:[%s1 + $0x1c] sm:$0xf]
    %v124 = vld [vmem:[%s2] sm:$0xff]
    %v125 = vld [vmem:[%s2 + $0x8] sm:$0xff]
    %v126 = vld [vmem:[%s2 + $0x10] sm:$0xff]
    %v127 = vld [vmem:[%s2 + $0x18] sm:$0xff]
    %v128 = vld [vmem:[%s3] sm:$0xff]
    %v129 = vld [vmem:[%s3 + $0x8] sm:$0xff]
    %v130 = vld [vmem:[%s3 + $0x10] sm:$0xff]
    %v131 = vld [vmem:[%s3 + $0x18] sm:$0xff]
    %v132 = vld [vmem:[%s0] sm:$0xff]
    %v133 = vld [vmem:[%s0 + $0x8] sm:$0xff]
    %v134 = vld [vmem:[%s0 + $0x10] sm:$0xff]
    %v135 = vld [vmem:[%s0 + $0x18] sm:$0xff]
    %137 = vset.pattern.permute.xlu0 0
    %138 = vperm.xlu0 %137, %v124
    %v139 = vpop.permute.xlu0 %138
    %142 = vset.pattern.permute.xlu0 0
    %143 = vperm.xlu0 %142, %v125
    %v144 = vpop.permute.xlu0 %143
    %147 = vset.pattern.permute.xlu0 0
    %148 = vperm.xlu0 %147, %v126
    %v149 = vpop.permute.xlu0 %148
    %152 = vset.pattern.permute.xlu0 0
    %153 = vperm.xlu0 %152, %v127
    %v154 = vpop.permute.xlu0 %153
    %v156 = vmul.f32 %v132, %v139
    %v157 = vmul.f32 %v133, %v144
    %v158 = vmul.f32 %v134, %v149
    %v159 = vmul.f32 %v135, %v154
    %v160 = vld [vmem:[#allocation2] sm:$0xf]
    %v161 = vld [vmem:[#allocation2 + $0x4] sm:$0xf]
    %v162 = vld [vmem:[#allocation2 + $0x8] sm:$0xf]
    %v163 = vld [vmem:[#allocation2 + $0xc] sm:$0xf]
    %v164 = vld [vmem:[#allocation2 + $0x10] sm:$0xf]
    %v165 = vld [vmem:[#allocation2 + $0x14] sm:$0xf]
    %v166 = vld [vmem:[#allocation2 + $0x18] sm:$0xf]
    %v167 = vld [vmem:[#allocation2 + $0x1c] sm:$0xf]
    %v168 = vld [vmem:[#allocation2 + $0x20] sm:$0xf]
    %v169 = vld [vmem:[#allocation2 + $0x24] sm:$0xf]
    %v170 = vld [vmem:[#allocation2 + $0x28] sm:$0xf]
    %v171 = vld [vmem:[#allocation2 + $0x2c] sm:$0xf]
    %v172 = vld [vmem:[#allocation2 + $0x30] sm:$0xf]
    %v173 = vld [vmem:[#allocation2 + $0x34] sm:$0xf]
    %v174 = vld [vmem:[#allocation2 + $0x38] sm:$0xf]
    %v175 = vld [vmem:[#allocation2 + $0x3c] sm:$0xf]
    %v176 = vld [vmem:[%s7] sm:$0x1]
    %v177 = vld [vmem:[#allocation5] sm:$0xf]
    %v178 = vld [vmem:[#allocation5 + $0x4] sm:$0xf]
    %v179 = vld [vmem:[#allocation5 + $0x8] sm:$0xf]
    %v180 = vld [vmem:[#allocation5 + $0xc] sm:$0xf]
    %v181 = vld [vmem:[#allocation5 + $0x10] sm:$0xf]
    %v182 = vld [vmem:[#allocation5 + $0x14] sm:$0xf]
    %v183 = vld [vmem:[#allocation5 + $0x18] sm:$0xf]
    %v184 = vld [vmem:[#allocation5 + $0x1c] sm:$0xf]
    %v185 = vld [vmem:[#allocation5 + $0x20] sm:$0xf]
    %v186 = vld [vmem:[#allocation5 + $0x24] sm:$0xf]
    %v187 = vld [vmem:[#allocation5 + $0x28] sm:$0xf]
    %v188 = vld [vmem:[#allocation5 + $0x2c] sm:$0xf]
    %v189 = vld [vmem:[#allocation5 + $0x30] sm:$0xf]
    %v190 = vld [vmem:[#allocation5 + $0x34] sm:$0xf]
    %v191 = vld [vmem:[#allocation5 + $0x38] sm:$0xf]
    %v192 = vld [vmem:[#allocation5 + $0x3c] sm:$0xf]
    %v193 = vld [vmem:[%s9] sm:$0x1]
    %v194 = vpack.c.bf16 %v157, %v156
    %v195 = vpack.c.bf16 %v159, %v158
    %v204 = vunpack.c.l.b16 %v116
    %v205 = vunpack.c.l.b16 %v117
    %v206 = vunpack.c.l.b16 %v118
    %v207 = vunpack.c.l.b16 %v119
    %v208 = vunpack.c.l.b16 %v120
    %v209 = vunpack.c.l.b16 %v121
    %v210 = vunpack.c.l.b16 %v122
    %v211 = vunpack.c.l.b16 %v123
    %v212 = vpack.c.b16 %v205, %v204
    %v213 = vpack.c.b16 %v207, %v206
    %v214 = vpack.c.b16 %v209, %v208
    %v215 = vpack.c.b16 %v211, %v210
    %vm216 = vcmask 261120
    %v218 = vsel %vm216, %v212, 0
    %v221 = vsel %vm216, %v213, 0
    %v224 = vsel %vm216, %v214, 0
    %v227 = vsel %vm216, %v215, 0
    %229 = vmatprep.subr.bf16.mxu0 0
    %230 = vmatpush1.bf16.msra.mxu0 0
    %231 = vmatprep.subr.bf16.mxu0 0
    %232 = vmatpush1.bf16.msra.mxu0 0
    %233 = vmatprep.subr.bf16.mxu0 0
    %234 = vmatpush1.bf16.msra.mxu0 0
    %235 = vmatprep.subr.bf16.mxu0 0
    %236 = vmatpush1.bf16.msra.mxu0 0
    %237 = vmatprep.subr.bf16.mxu0 0
    %238 = vmatpush1.bf16.msra.mxu0 0
    %239 = vmatprep.subr.bf16.mxu0 0
    %240 = vmatpush1.bf16.msra.mxu0 0
    %241 = vmatprep.subr.bf16.mxu0 0
    %242 = vmatpush1.bf16.msra.mxu0 %v195
    %243 = vmatprep.subr.bf16.mxu0 0
    %244 = vmatpush1.bf16.msra.mxu0 %v194
    %245 = vmatprep.subr.bf16.mxu0 0
    %246 = vmatpush2.bf16.msra.mxu0 0
    %247 = vmatprep.subr.bf16.mxu0 0
    %248 = vmatpush2.bf16.msra.mxu0 0
    %249 = vmatprep.subr.bf16.mxu0 0
    %250 = vmatpush2.bf16.msra.mxu0 0
    %251 = vmatprep.subr.bf16.mxu0 0
    %252 = vmatpush2.bf16.msra.mxu0 0
    %253 = vmatprep.subr.bf16.mxu0 0
    %254 = vmatpush2.bf16.msra.mxu0 0
    %255 = vmatprep.subr.bf16.mxu0 0
    %256 = vmatpush2.bf16.msra.mxu0 0
    %257 = vmatprep.subr.bf16.mxu0 0
    %258 = vmatpush2.bf16.msra.mxu0 0
    %259 = vmatprep.subr.bf16.mxu0 0
    %260 = vmatpush2.bf16.msra.mxu0 0
    %261 = vmatprep.mubr.bf16.mxu0 0
    %262 = vmatmul.mubr.bf16.gmra.mxu0 %v218
    %v263 = vpop.f32.mrf.mxu0
    %v264 = vadd.f32 0.0, %v263
    %v265 = vpop.f32.mrf.mxu0
    %v266 = vpop.f32.mrf.mxu0
    %v267 = vadd.f32 0.0, %v266
    %v268 = vpop.f32.mrf.mxu0
    %269 = vmatprep.mubr.bf16.mxu0 0
    %270 = vmatmul.mubr.bf16.gmra.mxu0 %v221
    %v271 = vpop.f32.mrf.mxu0
    %v272 = vadd.f32 0.0, %v271
    %v273 = vpop.f32.mrf.mxu0
    %v274 = vpop.f32.mrf.mxu0
    %v275 = vadd.f32 0.0, %v274
    %v276 = vpop.f32.mrf.mxu0
    %277 = vmatprep.mubr.bf16.mxu0 0
    %278 = vmatmul.mubr.bf16.gmra.mxu0 %v224
    %v279 = vpop.f32.mrf.mxu0
    %v280 = vadd.f32 0.0, %v279
    %v281 = vpop.f32.mrf.mxu0
    %v282 = vpop.f32.mrf.mxu0
    %v283 = vadd.f32 0.0, %v282
    %v284 = vpop.f32.mrf.mxu0
    %285 = vmatprep.mubr.bf16.mxu0 0
    %286 = vmatmul.mubr.bf16.gmra.mxu0 %v227
    %v287 = vpop.f32.mrf.mxu0
    %v288 = vadd.f32 0.0, %v287
    %v289 = vpop.f32.mrf.mxu0
    %v290 = vpop.f32.mrf.mxu0
    %v291 = vadd.f32 0.0, %v290
    %v292 = vpop.f32.mrf.mxu0
    %293 = vdwg.mxu0
    %v294 = vadd.f32 %v264, %v156
    %v295 = vadd.f32 %v267, %v157
    %v296 = vadd.f32 %v272, %v158
    %v297 = vadd.f32 %v275, %v159
    %v298 = vpack.c.bf16 %v295, %v294
    %v299 = vpack.c.bf16 %v297, %v296
    %v301 = vlaneseq
    %v302 = vshrl.u32 %v301, 7
    %v303 = vsub.s32 0, %v302
    %v304 = vrot.slane %v176, %v303
    %v322 = vunpack.c.l.b16 %v160
    %v323 = vunpack.c.l.b16 %v161
    %v324 = vunpack.c.l.b16 %v162
    %v325 = vunpack.c.l.b16 %v163
    %v326 = vunpack.c.l.b16 %v164
    %v327 = vunpack.c.l.b16 %v165
    %v328 = vunpack.c.l.b16 %v166
    %v329 = vunpack.c.l.b16 %v167
    %v330 = vunpack.c.l.b16 %v168
    %v331 = vunpack.c.l.b16 %v169
    %v332 = vunpack.c.l.b16 %v170
    %v333 = vunpack.c.l.b16 %v171
    %v334 = vunpack.c.l.b16 %v172
    %v335 = vunpack.c.l.b16 %v173
    %v336 = vunpack.c.l.b16 %v174
    %v337 = vunpack.c.l.b16 %v175
    %v338 = vpack.c.b16 %v323, %v322
    %v339 = vpack.c.b16 %v325, %v324
    %v340 = vpack.c.b16 %v327, %v326
    %v341 = vpack.c.b16 %v329, %v328
    %v342 = vpack.c.b16 %v331, %v330
    %v343 = vpack.c.b16 %v333, %v332
    %v344 = vpack.c.b16 %v335, %v334
    %v345 = vpack.c.b16 %v337, %v336
    %354 = vmatprep.subr.bf16.mxu0 0
    %355 = vmatpush1.bf16.msra.mxu0 %v345
    %356 = vmatprep.subr.bf16.mxu0 0
    %357 = vmatpush1.bf16.msra.mxu0 %v344
    %358 = vmatprep.subr.bf16.mxu0 0
    %359 = vmatpush1.bf16.msra.mxu0 %v343
    %360 = vmatprep.subr.bf16.mxu0 0
    %361 = vmatpush1.bf16.msra.mxu0 %v342
    %362 = vmatprep.subr.bf16.mxu0 0
    %363 = vmatpush1.bf16.msra.mxu0 %v341
    %364 = vmatprep.subr.bf16.mxu0 0
    %365 = vmatpush1.bf16.msra.mxu0 %v340
    %366 = vmatprep.subr.bf16.mxu0 0
    %367 = vmatpush1.bf16.msra.mxu0 %v339
    %368 = vmatprep.subr.bf16.mxu0 0
    %369 = vmatpush1.bf16.msra.mxu0 %v338
    %370 = vmatprep.subr.bf16.mxu0 0
    %371 = vmatpush2.bf16.msra.mxu0 0
    %372 = vmatprep.subr.bf16.mxu0 0
    %373 = vmatpush2.bf16.msra.mxu0 0
    %374 = vmatprep.subr.bf16.mxu0 0
    %375 = vmatpush2.bf16.msra.mxu0 0
    %376 = vmatprep.subr.bf16.mxu0 0
    %377 = vmatpush2.bf16.msra.mxu0 0
    %378 = vmatprep.subr.bf16.mxu0 0
    %379 = vmatpush2.bf16.msra.mxu0 0
    %380 = vmatprep.subr.bf16.mxu0 0
    %381 = vmatpush2.bf16.msra.mxu0 0
    %382 = vmatprep.subr.bf16.mxu0 0
    %383 = vmatpush2.bf16.msra.mxu0 0
    %384 = vmatprep.subr.bf16.mxu0 0
    %385 = vmatpush2.bf16.msra.mxu0 0
    %386 = vmatprep.mubr.bf16.mxu0 0
    %387 = vmatmul.mubr.bf16.gmra.mxu0 %v298
    %v388 = vpop.f32.mrf.mxu0
    %v389 = vadd.f32 %v304, %v388
    %v390 = vpop.f32.mrf.mxu0
    %v391 = vpop.f32.mrf.mxu0
    %v392 = vadd.f32 %v304, %v391
    %v393 = vpop.f32.mrf.mxu0
    %394 = vmatprep.mubr.bf16.mxu0 0
    %395 = vmatmul.mubr.bf16.gmra.mxu0 %v299
    %v396 = vpop.f32.mrf.mxu0
    %v397 = vadd.f32 %v304, %v396
    %v398 = vpop.f32.mrf.mxu0
    %v399 = vpop.f32.mrf.mxu0
    %v400 = vadd.f32 %v304, %v399
    %v401 = vpop.f32.mrf.mxu0
    %402 = vdwg.mxu0
    %v403 = vadd.f32 %v280, %v280
    %v404 = vadd.f32 %v283, %v283
    %v405 = vadd.f32 %v288, %v288
    %v406 = vadd.f32 %v291, %v291
    %v407 = vpack.c.bf16 %v404, %v403
    %v408 = vpack.c.bf16 %v406, %v405
    %v410 = vlaneseq
    %v411 = vshrl.u32 %v410, 7
    %v412 = vsub.s32 0, %v411
    %v413 = vrot.slane %v193, %v412
    %v431 = vunpack.c.l.b16 %v177
    %v432 = vunpack.c.l.b16 %v178
    %v433 = vunpack.c.l.b16 %v179
    %v434 = vunpack.c.l.b16 %v180
    %v435 = vunpack.c.l.b16 %v181
    %v436 = vunpack.c.l.b16 %v182
    %v437 = vunpack.c.l.b16 %v183
    %v438 = vunpack.c.l.b16 %v184
    %v439 = vunpack.c.l.b16 %v185
    %v440 = vunpack.c.l.b16 %v186
    %v441 = vunpack.c.l.b16 %v187
    %v442 = vunpack.c.l.b16 %v188
    %v443 = vunpack.c.l.b16 %v189
    %v444 = vunpack.c.l.b16 %v190
    %v445 = vunpack.c.l.b16 %v191
    %v446 = vunpack.c.l.b16 %v192
    %v447 = vpack.c.b16 %v432, %v431
    %v448 = vpack.c.b16 %v434, %v433
    %v449 = vpack.c.b16 %v436, %v435
    %v450 = vpack.c.b16 %v438, %v437
    %v451 = vpack.c.b16 %v440, %v439
    %v452 = vpack.c.b16 %v442, %v441
    %v453 = vpack.c.b16 %v444, %v443
    %v454 = vpack.c.b16 %v446, %v445
    %463 = vmatprep.subr.bf16.mxu0 0
    %464 = vmatpush1.bf16.msra.mxu0 %v454
    %465 = vmatprep.subr.bf16.mxu0 0
    %466 = vmatpush1.bf16.msra.mxu0 %v453
    %467 = vmatprep.subr.bf16.mxu0 0
    %468 = vmatpush1.bf16.msra.mxu0 %v452
    %469 = vmatprep.subr.bf16.mxu0 0
    %470 = vmatpush1.bf16.msra.mxu0 %v451
    %471 = vmatprep.subr.bf16.mxu0 0
    %472 = vmatpush1.bf16.msra.mxu0 %v450
    %473 = vmatprep.subr.bf16.mxu0 0
    %474 = vmatpush1.bf16.msra.mxu0 %v449
    %475 = vmatprep.subr.bf16.mxu0 0
    %476 = vmatpush1.bf16.msra.mxu0 %v448
    %477 = vmatprep.subr.bf16.mxu0 0
    %478 = vmatpush1.bf16.msra.mxu0 %v447
    %479 = vmatprep.subr.bf16.mxu0 0
    %480 = vmatpush2.bf16.msra.mxu0 0
    %481 = vmatprep.subr.bf16.mxu0 0
    %482 = vmatpush2.bf16.msra.mxu0 0
    %483 = vmatprep.subr.bf16.mxu0 0
    %484 = vmatpush2.bf16.msra.mxu0 0
    %485 = vmatprep.subr.bf16.mxu0 0
    %486 = vmatpush2.bf16.msra.mxu0 0
    %487 = vmatprep.subr.bf16.mxu0 0
    %488 = vmatpush2.bf16.msra.mxu0 0
    %489 = vmatprep.subr.bf16.mxu0 0
    %490 = vmatpush2.bf16.msra.mxu0 0
    %491 = vmatprep.subr.bf16.mxu0 0
    %492 = vmatpush2.bf16.msra.mxu0 0
    %493 = vmatprep.subr.bf16.mxu0 0
    %494 = vmatpush2.bf16.msra.mxu0 0
    %495 = vmatprep.mubr.bf16.mxu0 0
    %496 = vmatmul.mubr.bf16.gmra.mxu0 %v407
    %v497 = vpop.f32.mrf.mxu0
    %v498 = vadd.f32 %v413, %v497
    %v499 = vpop.f32.mrf.mxu0
    %v500 = vpop.f32.mrf.mxu0
    %v501 = vadd.f32 %v413, %v500
    %v502 = vpop.f32.mrf.mxu0
    %503 = vmatprep.mubr.bf16.mxu0 0
    %504 = vmatmul.mubr.bf16.gmra.mxu0 %v408
    %v505 = vpop.f32.mrf.mxu0
    %v506 = vadd.f32 %v413, %v505
    %v507 = vpop.f32.mrf.mxu0
    %v508 = vpop.f32.mrf.mxu0
    %v509 = vadd.f32 %v413, %v508
    %v510 = vpop.f32.mrf.mxu0
    %511 = vdwg.mxu0
    %v512 = vmax.f32 %v389, 0.0
    %v513 = vmax.f32 %v392, 0.0
    %v514 = vmax.f32 %v397, 0.0
    %v515 = vmax.f32 %v400, 0.0
    %v516 = vmul.f32 %v512, %v139
    %v517 = vmul.f32 %v513, %v144
    %v518 = vmul.f32 %v514, %v149
    %v519 = vmul.f32 %v515, %v154
    %v520 = vmax.f32 %v498, 0.0
    %v521 = vmax.f32 %v501, 0.0
    %v522 = vmax.f32 %v506, 0.0
    %v523 = vmax.f32 %v509, 0.0
    %525 = vset.pattern.permute.xlu0 0
    %526 = vperm.xlu0 %525, %v128
    %v527 = vpop.permute.xlu0 %526
    %530 = vset.pattern.permute.xlu0 0
    %531 = vperm.xlu0 %530, %v129
    %v532 = vpop.permute.xlu0 %531
    %535 = vset.pattern.permute.xlu0 0
    %536 = vperm.xlu0 %535, %v130
    %v537 = vpop.permute.xlu0 %536
    %540 = vset.pattern.permute.xlu0 0
    %541 = vperm.xlu0 %540, %v131
    %v542 = vpop.permute.xlu0 %541
    %v544 = vmul.f32 %v520, %v527
    %v545 = vmul.f32 %v521, %v532
    %v546 = vmul.f32 %v522, %v537
    %v547 = vmul.f32 %v523, %v542
    %v548 = vld [vmem:[#allocation7] sm:$0xf]
    %v549 = vld [vmem:[#allocation7 + $0x4] sm:$0xf]
    %v550 = vld [vmem:[#allocation7 + $0x8] sm:$0xf]
    %v551 = vld [vmem:[#allocation7 + $0xc] sm:$0xf]
    %v552 = vld [vmem:[#allocation7 + $0x10] sm:$0xf]
    %v553 = vld [vmem:[#allocation7 + $0x14] sm:$0xf]
    %v554 = vld [vmem:[#allocation7 + $0x18] sm:$0xf]
    %v555 = vld [vmem:[#allocation7 + $0x1c] sm:$0xf]
    %v556 = vld [vmem:[#allocation7 + $0x20] sm:$0xf]
    %v557 = vld [vmem:[#allocation7 + $0x24] sm:$0xf]
    %v558 = vld [vmem:[#allocation7 + $0x28] sm:$0xf]
    %v559 = vld [vmem:[#allocation7 + $0x2c] sm:$0xf]
    %v560 = vld [vmem:[#allocation7 + $0x30] sm:$0xf]
    %v561 = vld [vmem:[#allocation7 + $0x34] sm:$0xf]
    %v562 = vld [vmem:[#allocation7 + $0x38] sm:$0xf]
    %v563 = vld [vmem:[#allocation7 + $0x3c] sm:$0xf]
    %v564 = vld [vmem:[%s11] sm:$0x1]
    %v565 = vld [vmem:[#allocation8] sm:$0xf]
    %v566 = vld [vmem:[#allocation8 + $0x4] sm:$0xf]
    %v567 = vld [vmem:[#allocation8 + $0x8] sm:$0xf]
    %v568 = vld [vmem:[#allocation8 + $0xc] sm:$0xf]
    %v569 = vld [vmem:[#allocation8 + $0x10] sm:$0xf]
    %v570 = vld [vmem:[#allocation8 + $0x14] sm:$0xf]
    %v571 = vld [vmem:[#allocation8 + $0x18] sm:$0xf]
    %v572 = vld [vmem:[#allocation8 + $0x1c] sm:$0xf]
    %v573 = vld [vmem:[#allocation8 + $0x20] sm:$0xf]
    %v574 = vld [vmem:[#allocation8 + $0x24] sm:$0xf]
    %v575 = vld [vmem:[#allocation8 + $0x28] sm:$0xf]
    %v576 = vld [vmem:[#allocation8 + $0x2c] sm:$0xf]
    %v577 = vld [vmem:[#allocation8 + $0x30] sm:$0xf]
    %v578 = vld [vmem:[#allocation8 + $0x34] sm:$0xf]
    %v579 = vld [vmem:[#allocation8 + $0x38] sm:$0xf]
    %v580 = vld [vmem:[#allocation8 + $0x3c] sm:$0xf]
    %v581 = vld [vmem:[%s13] sm:$0x1]
    %v582 = vpack.c.bf16 %v517, %v516
    %v583 = vpack.c.bf16 %v519, %v518
    %584 = vmatprep.subr.bf16.mxu0 0
    %585 = vmatpush1.bf16.msra.mxu0 0
    %586 = vmatprep.subr.bf16.mxu0 0
    %587 = vmatpush1.bf16.msra.mxu0 0
    %588 = vmatprep.subr.bf16.mxu0 0
    %589 = vmatpush1.bf16.msra.mxu0 0
    %590 = vmatprep.subr.bf16.mxu0 0
    %591 = vmatpush1.bf16.msra.mxu0 0
    %592 = vmatprep.subr.bf16.mxu0 0
    %593 = vmatpush1.bf16.msra.mxu0 0
    %594 = vmatprep.subr.bf16.mxu0 0
    %595 = vmatpush1.bf16.msra.mxu0 0
    %596 = vmatprep.subr.bf16.mxu0 0
    %597 = vmatpush1.bf16.msra.mxu0 %v583
    %598 = vmatprep.subr.bf16.mxu0 0
    %599 = vmatpush1.bf16.msra.mxu0 %v582
    %600 = vmatprep.subr.bf16.mxu0 0
    %601 = vmatpush2.bf16.msra.mxu0 0
    %602 = vmatprep.subr.bf16.mxu0 0
    %603 = vmatpush2.bf16.msra.mxu0 0
    %604 = vmatprep.subr.bf16.mxu0 0
    %605 = vmatpush2.bf16.msra.mxu0 0
    %606 = vmatprep.subr.bf16.mxu0 0
    %607 = vmatpush2.bf16.msra.mxu0 0
    %608 = vmatprep.subr.bf16.mxu0 0
    %609 = vmatpush2.bf16.msra.mxu0 0
    %610 = vmatprep.subr.bf16.mxu0 0
    %611 = vmatpush2.bf16.msra.mxu0 0
    %612 = vmatprep.subr.bf16.mxu0 0
    %613 = vmatpush2.bf16.msra.mxu0 0
    %614 = vmatprep.subr.bf16.mxu0 0
    %615 = vmatpush2.bf16.msra.mxu0 0
    %616 = vmatprep.mubr.bf16.mxu0 0
    %617 = vmatmul.mubr.bf16.gmra.mxu0 %v218
    %v618 = vpop.f32.mrf.mxu0
    %v619 = vadd.f32 0.0, %v618
    %v620 = vpop.f32.mrf.mxu0
    %v621 = vpop.f32.mrf.mxu0
    %v622 = vadd.f32 0.0, %v621
    %v623 = vpop.f32.mrf.mxu0
    %624 = vmatprep.mubr.bf16.mxu0 0
    %625 = vmatmul.mubr.bf16.gmra.mxu0 %v221
    %v626 = vpop.f32.mrf.mxu0
    %v627 = vadd.f32 0.0, %v626
    %v628 = vpop.f32.mrf.mxu0
    %v629 = vpop.f32.mrf.mxu0
    %v630 = vadd.f32 0.0, %v629
    %v631 = vpop.f32.mrf.mxu0
    %632 = vmatprep.mubr.bf16.mxu0 0
    %633 = vmatmul.mubr.bf16.gmra.mxu0 %v224
    %v634 = vpop.f32.mrf.mxu0
    %v635 = vadd.f32 0.0, %v634
    %v636 = vpop.f32.mrf.mxu0
    %v637 = vpop.f32.mrf.mxu0
    %v638 = vadd.f32 0.0, %v637
    %v639 = vpop.f32.mrf.mxu0
    %640 = vmatprep.mubr.bf16.mxu0 0
    %641 = vmatmul.mubr.bf16.gmra.mxu0 %v227
    %v642 = vpop.f32.mrf.mxu0
    %v643 = vadd.f32 0.0, %v642
    %v644 = vpop.f32.mrf.mxu0
    %v645 = vpop.f32.mrf.mxu0
    %v646 = vadd.f32 0.0, %v645
    %v647 = vpop.f32.mrf.mxu0
    %648 = vdwg.mxu0
    %v649 = vadd.f32 %v619, %v516
    %v650 = vadd.f32 %v622, %v517
    %v651 = vadd.f32 %v627, %v518
    %v652 = vadd.f32 %v630, %v519
    %v653 = vpack.c.bf16 %v650, %v649
    %v654 = vpack.c.bf16 %v652, %v651
    %v656 = vlaneseq
    %v657 = vshrl.u32 %v656, 7
    %v658 = vsub.s32 0, %v657
    %v659 = vrot.slane %v564, %v658
    %v677 = vunpack.c.l.b16 %v548
    %v678 = vunpack.c.l.b16 %v549
    %v679 = vunpack.c.l.b16 %v550
    %v680 = vunpack.c.l.b16 %v551
    %v681 = vunpack.c.l.b16 %v552
    %v682 = vunpack.c.l.b16 %v553
    %v683 = vunpack.c.l.b16 %v554
    %v684 = vunpack.c.l.b16 %v555
    %v685 = vunpack.c.l.b16 %v556
    %v686 = vunpack.c.l.b16 %v557
    %v687 = vunpack.c.l.b16 %v558
    %v688 = vunpack.c.l.b16 %v559
    %v689 = vunpack.c.l.b16 %v560
    %v690 = vunpack.c.l.b16 %v561
    %v691 = vunpack.c.l.b16 %v562
    %v692 = vunpack.c.l.b16 %v563
    %v693 = vpack.c.b16 %v678, %v677
    %v694 = vpack.c.b16 %v680, %v679
    %v695 = vpack.c.b16 %v682, %v681
    %v696 = vpack.c.b16 %v684, %v683
    %v697 = vpack.c.b16 %v686, %v685
    %v698 = vpack.c.b16 %v688, %v687
    %v699 = vpack.c.b16 %v690, %v689
    %v700 = vpack.c.b16 %v692, %v691
    %709 = vmatprep.subr.bf16.mxu0 0
    %710 = vmatpush1.bf16.msra.mxu0 %v700
    %711 = vmatprep.subr.bf16.mxu0 0
    %712 = vmatpush1.bf16.msra.mxu0 %v699
    %713 = vmatprep.subr.bf16.mxu0 0
    %714 = vmatpush1.bf16.msra.mxu0 %v698
    %715 = vmatprep.subr.bf16.mxu0 0
    %716 = vmatpush1.bf16.msra.mxu0 %v697
    %717 = vmatprep.subr.bf16.mxu0 0
    %718 = vmatpush1.bf16.msra.mxu0 %v696
    %719 = vmatprep.subr.bf16.mxu0 0
    %720 = vmatpush1.bf16.msra.mxu0 %v695
    %721 = vmatprep.subr.bf16.mxu0 0
    %722 = vmatpush1.bf16.msra.mxu0 %v694
    %723 = vmatprep.subr.bf16.mxu0 0
    %724 = vmatpush1.bf16.msra.mxu0 %v693
    %725 = vmatprep.subr.bf16.mxu0 0
    %726 = vmatpush2.bf16.msra.mxu0 0
    %727 = vmatprep.subr.bf16.mxu0 0
    %728 = vmatpush2.bf16.msra.mxu0 0
    %729 = vmatprep.subr.bf16.mxu0 0
    %730 = vmatpush2.bf16.msra.mxu0 0
    %731 = vmatprep.subr.bf16.mxu0 0
    %732 = vmatpush2.bf16.msra.mxu0 0
    %733 = vmatprep.subr.bf16.mxu0 0
    %734 = vmatpush2.bf16.msra.mxu0 0
    %735 = vmatprep.subr.bf16.mxu0 0
    %736 = vmatpush2.bf16.msra.mxu0 0
    %737 = vmatprep.subr.bf16.mxu0 0
    %738 = vmatpush2.bf16.msra.mxu0 0
    %739 = vmatprep.subr.bf16.mxu0 0
    %740 = vmatpush2.bf16.msra.mxu0 0
    %741 = vmatprep.mubr.bf16.mxu0 0
    %742 = vmatmul.mubr.bf16.gmra.mxu0 %v653
    %v743 = vpop.f32.mrf.mxu0
    %v744 = vadd.f32 %v659, %v743
    %v745 = vpop.f32.mrf.mxu0
    %v746 = vpop.f32.mrf.mxu0
    %v747 = vadd.f32 %v659, %v746
    %v748 = vpop.f32.mrf.mxu0
    %749 = vmatprep.mubr.bf16.mxu0 0
    %750 = vmatmul.mubr.bf16.gmra.mxu0 %v654
    %v751 = vpop.f32.mrf.mxu0
    %v752 = vadd.f32 %v659, %v751
    %v753 = vpop.f32.mrf.mxu0
    %v754 = vpop.f32.mrf.mxu0
    %v755 = vadd.f32 %v659, %v754
    %v756 = vpop.f32.mrf.mxu0
    %757 = vdwg.mxu0
    %v758 = vadd.f32 %v635, %v544
    %v759 = vadd.f32 %v638, %v545
    %v760 = vadd.f32 %v643, %v546
    %v761 = vadd.f32 %v646, %v547
    %v762 = vpack.c.bf16 %v759, %v758
    %v763 = vpack.c.bf16 %v761, %v760
    %v765 = vlaneseq
    %v766 = vshrl.u32 %v765, 7
    %v767 = vsub.s32 0, %v766
    %v768 = vrot.slane %v581, %v767
    %v786 = vunpack.c.l.b16 %v565
    %v787 = vunpack.c.l.b16 %v566
    %v788 = vunpack.c.l.b16 %v567
    %v789 = vunpack.c.l.b16 %v568
    %v790 = vunpack.c.l.b16 %v569
    %v791 = vunpack.c.l.b16 %v570
    %v792 = vunpack.c.l.b16 %v571
    %v793 = vunpack.c.l.b16 %v572
    %v794 = vunpack.c.l.b16 %v573
    %v795 = vunpack.c.l.b16 %v574
    %v796 = vunpack.c.l.b16 %v575
    %v797 = vunpack.c.l.b16 %v576
    %v798 = vunpack.c.l.b16 %v577
    %v799 = vunpack.c.l.b16 %v578
    %v800 = vunpack.c.l.b16 %v579
    %v801 = vunpack.c.l.b16 %v580
    %v802 = vpack.c.b16 %v787, %v786
    %v803 = vpack.c.b16 %v789, %v788
    %v804 = vpack.c.b16 %v791, %v790
    %v805 = vpack.c.b16 %v793, %v792
    %v806 = vpack.c.b16 %v795, %v794
    %v807 = vpack.c.b16 %v797, %v796
    %v808 = vpack.c.b16 %v799, %v798
    %v809 = vpack.c.b16 %v801, %v800
    %818 = vmatprep.subr.bf16.mxu0 0
    %819 = vmatpush1.bf16.msra.mxu0 %v809
    %820 = vmatprep.subr.bf16.mxu0 0
    %821 = vmatpush1.bf16.msra.mxu0 %v808
    %822 = vmatprep.subr.bf16.mxu0 0
    %823 = vmatpush1.bf16.msra.mxu0 %v807
    %824 = vmatprep.subr.bf16.mxu0 0
    %825 = vmatpush1.bf16.msra.mxu0 %v806
    %826 = vmatprep.subr.bf16.mxu0 0
    %827 = vmatpush1.bf16.msra.mxu0 %v805
    %828 = vmatprep.subr.bf16.mxu0 0
    %829 = vmatpush1.bf16.msra.mxu0 %v804
    %830 = vmatprep.subr.bf16.mxu0 0
    %831 = vmatpush1.bf16.msra.mxu0 %v803
    %832 = vmatprep.subr.bf16.mxu0 0
    %833 = vmatpush1.bf16.msra.mxu0 %v802
    %834 = vmatprep.subr.bf16.mxu0 0
    %835 = vmatpush2.bf16.msra.mxu0 0
    %836 = vmatprep.subr.bf16.mxu0 0
    %837 = vmatpush2.bf16.msra.mxu0 0
    %838 = vmatprep.subr.bf16.mxu0 0
    %839 = vmatpush2.bf16.msra.mxu0 0
    %840 = vmatprep.subr.bf16.mxu0 0
    %841 = vmatpush2.bf16.msra.mxu0 0
    %842 = vmatprep.subr.bf16.mxu0 0
    %843 = vmatpush2.bf16.msra.mxu0 0
    %844 = vmatprep.subr.bf16.mxu0 0
    %845 = vmatpush2.bf16.msra.mxu0 0
    %846 = vmatprep.subr.bf16.mxu0 0
    %847 = vmatpush2.bf16.msra.mxu0 0
    %848 = vmatprep.subr.bf16.mxu0 0
    %849 = vmatpush2.bf16.msra.mxu0 0
    %850 = vmatprep.mubr.bf16.mxu0 0
    %851 = vmatmul.mubr.bf16.gmra.mxu0 %v762
    %v852 = vpop.f32.mrf.mxu0
    %v853 = vadd.f32 %v768, %v852
    %v854 = vpop.f32.mrf.mxu0
    %v855 = vpop.f32.mrf.mxu0
    %v856 = vadd.f32 %v768, %v855
    %v857 = vpop.f32.mrf.mxu0
    %858 = vmatprep.mubr.bf16.mxu0 0
    %859 = vmatmul.mubr.bf16.gmra.mxu0 %v763
    %v860 = vpop.f32.mrf.mxu0
    %v861 = vadd.f32 %v768, %v860
    %v862 = vpop.f32.mrf.mxu0
    %v863 = vpop.f32.mrf.mxu0
    %v864 = vadd.f32 %v768, %v863
    %v865 = vpop.f32.mrf.mxu0
    %866 = vdwg.mxu0
    %v867 = vmax.f32 %v744, 0.0
    %v868 = vmax.f32 %v747, 0.0
    %v869 = vmax.f32 %v752, 0.0
    %v870 = vmax.f32 %v755, 0.0
    %v871 = vmul.f32 %v867, %v139
    %v872 = vmul.f32 %v868, %v144
    %v873 = vmul.f32 %v869, %v149
    %v874 = vmul.f32 %v870, %v154
    %v875 = vmax.f32 %v853, 0.0
    %v876 = vmax.f32 %v856, 0.0
    %v877 = vmax.f32 %v861, 0.0
    %v878 = vmax.f32 %v864, 0.0
    %v879 = vmul.f32 %v875, %v527
    %v880 = vmul.f32 %v876, %v532
    %v881 = vmul.f32 %v877, %v537
    %v882 = vmul.f32 %v878, %v542
    %v883 = vld [vmem:[%s4] sm:$0x1]
    %v884 = vpack.c.bf16 %v872, %v871
    %v885 = vpack.c.bf16 %v874, %v873
    %v887 = vsel %vm216, %v883, 0
    %889 = vmatprep.subr.bf16.mxu0 0
    %890 = vmatpush1.bf16.msra.mxu0 0
    %891 = vmatprep.subr.bf16.mxu0 0
    %892 = vmatpush1.bf16.msra.mxu0 0
    %893 = vmatprep.subr.bf16.mxu0 0
    %894 = vmatpush1.bf16.msra.mxu0 0
    %895 = vmatprep.subr.bf16.mxu0 0
    %896 = vmatpush1.bf16.msra.mxu0 0
    %897 = vmatprep.subr.bf16.mxu0 0
    %898 = vmatpush1.bf16.msra.mxu0 0
    %899 = vmatprep.subr.bf16.mxu0 0
    %900 = vmatpush1.bf16.msra.mxu0 0
    %901 = vmatprep.subr.bf16.mxu0 0
    %902 = vmatpush1.bf16.msra.mxu0 %v885
    %903 = vmatprep.subr.bf16.mxu0 0
    %904 = vmatpush1.bf16.msra.mxu0 %v884
    %905 = vmatprep.subr.bf16.mxu0 0
    %906 = vmatpush2.bf16.msra.mxu0 0
    %907 = vmatprep.subr.bf16.mxu0 0
    %908 = vmatpush2.bf16.msra.mxu0 0
    %909 = vmatprep.subr.bf16.mxu0 0
    %910 = vmatpush2.bf16.msra.mxu0 0
    %911 = vmatprep.subr.bf16.mxu0 0
    %912 = vmatpush2.bf16.msra.mxu0 0
    %913 = vmatprep.subr.bf16.mxu0 0
    %914 = vmatpush2.bf16.msra.mxu0 0
    %915 = vmatprep.subr.bf16.mxu0 0
    %916 = vmatpush2.bf16.msra.mxu0 0
    %917 = vmatprep.subr.bf16.mxu0 0
    %918 = vmatpush2.bf16.msra.mxu0 0
    %919 = vmatprep.subr.bf16.mxu0 0
    %920 = vmatpush2.bf16.msra.mxu0 0
    %921 = vmatprep.mubr.bf16.mxu0 0
    %922 = vmatmul.mubr.bf16.gmra.mxu0 %v887
    %v923 = vpop.f32.mrf.mxu0
    %v924 = vadd.f32 0.0, %v923
    %v925 = vpop.f32.mrf.mxu0
    %v926 = vpop.f32.mrf.mxu0
    %v927 = vpop.f32.mrf.mxu0
    %928 = vdwg.mxu0
    %v929 = vld [vmem:[%s5] sm:$0x1]
    %v930 = vpack.c.bf16 %v880, %v879
    %v931 = vpack.c.bf16 %v882, %v881
    %v933 = vsel %vm216, %v929, 0
    %935 = vmatprep.subr.bf16.mxu0 0
    %936 = vmatpush1.bf16.msra.mxu0 0
    %937 = vmatprep.subr.bf16.mxu0 0
    %938 = vmatpush1.bf16.msra.mxu0 0
    %939 = vmatprep.subr.bf16.mxu0 0
    %940 = vmatpush1.bf16.msra.mxu0 0
    %941 = vmatprep.subr.bf16.mxu0 0
    %942 = vmatpush1.bf16.msra.mxu0 0
    %943 = vmatprep.subr.bf16.mxu0 0
    %944 = vmatpush1.bf16.msra.mxu0 0
    %945 = vmatprep.subr.bf16.mxu0 0
    %946 = vmatpush1.bf16.msra.mxu0 0
    %947 = vmatprep.subr.bf16.mxu0 0
    %948 = vmatpush1.bf16.msra.mxu0 %v931
    %949 = vmatprep.subr.bf16.mxu0 0
    %950 = vmatpush1.bf16.msra.mxu0 %v930
    %951 = vmatprep.subr.bf16.mxu0 0
    %952 = vmatpush2.bf16.msra.mxu0 0
    %953 = vmatprep.subr.bf16.mxu0 0
    %954 = vmatpush2.bf16.msra.mxu0 0
    %955 = vmatprep.subr.bf16.mxu0 0
    %956 = vmatpush2.bf16.msra.mxu0 0
    %957 = vmatprep.subr.bf16.mxu0 0
    %958 = vmatpush2.bf16.msra.mxu0 0
    %959 = vmatprep.subr.bf16.mxu0 0
    %960 = vmatpush2.bf16.msra.mxu0 0
    %961 = vmatprep.subr.bf16.mxu0 0
    %962 = vmatpush2.bf16.msra.mxu0 0
    %963 = vmatprep.subr.bf16.mxu0 0
    %964 = vmatpush2.bf16.msra.mxu0 0
    %965 = vmatprep.subr.bf16.mxu0 0
    %966 = vmatpush2.bf16.msra.mxu0 0
    %967 = vmatprep.mubr.bf16.mxu0 0
    %968 = vmatmul.mubr.bf16.gmra.mxu0 %v933
    %v969 = vpop.f32.mrf.mxu0
    %v970 = vadd.f32 0.0, %v969
    %v971 = vpop.f32.mrf.mxu0
    %v972 = vpop.f32.mrf.mxu0
    %v973 = vpop.f32.mrf.mxu0
    %974 = vdwg.mxu0
    %v975 = vpack.c.bf16 %v924, %v924
    %v976 = vpack.c.bf16 %v970, %v970
    %v977 = vld [vmem:[%s14] sm:$0xf]
    %v978 = vld [vmem:[%s14 + $0x4] sm:$0xf]
    %v979 = vld [vmem:[%s14 + $0x8] sm:$0xf]
    %v980 = vld [vmem:[%s14 + $0xc] sm:$0xf]
    %v981 = vld [vmem:[%s14 + $0x10] sm:$0xf]
    %v982 = vld [vmem:[%s14 + $0x14] sm:$0xf]
    %v983 = vld [vmem:[%s14 + $0x18] sm:$0xf]
    %v984 = vld [vmem:[%s14 + $0x1c] sm:$0xf]
    %v985 = vld [vmem:[%s14 + $0x20] sm:$0xf]
    %v986 = vld [vmem:[%s14 + $0x24] sm:$0xf]
    %v987 = vld [vmem:[%s14 + $0x28] sm:$0xf]
    %v988 = vld [vmem:[%s14 + $0x2c] sm:$0xf]
    %v989 = vld [vmem:[%s14 + $0x30] sm:$0xf]
    %v990 = vld [vmem:[%s14 + $0x34] sm:$0xf]
    %v991 = vld [vmem:[%s14 + $0x38] sm:$0xf]
    %v992 = vld [vmem:[%s14 + $0x3c] sm:$0xf]
    %v993 = vld [vmem:[%s14 + $0x40] sm:$0xf]
    %v994 = vld [vmem:[%s14 + $0x44] sm:$0xf]
    %v995 = vld [vmem:[%s14 + $0x48] sm:$0xf]
    %v996 = vld [vmem:[%s14 + $0x4c] sm:$0xf]
    %v997 = vld [vmem:[%s14 + $0x50] sm:$0xf]
    %v998 = vld [vmem:[%s14 + $0x54] sm:$0xf]
    %v999 = vld [vmem:[%s14 + $0x58] sm:$0xf]
    %v1000 = vld [vmem:[%s14 + $0x5c] sm:$0xf]
    %v1001 = vld [vmem:[%s14 + $0x60] sm:$0xf]
    %v1002 = vld [vmem:[%s14 + $0x64] sm:$0xf]
    %v1003 = vld [vmem:[%s14 + $0x68] sm:$0xf]
    %v1004 = vld [vmem:[%s14 + $0x6c] sm:$0xf]
    %v1005 = vld [vmem:[%s14 + $0x70] sm:$0xf]
    %v1006 = vld [vmem:[%s14 + $0x74] sm:$0xf]
    %v1007 = vld [vmem:[%s14 + $0x78] sm:$0xf]
    %v1008 = vld [vmem:[%s14 + $0x7c] sm:$0xf]
    %v1009 = vld [vmem:[%s15] sm:$0x1]
    %v1011 = vlaneseq
    %v1012 = vshrl.u32 %v1011, 7
    %v1013 = vsub.s32 0, %v1012
    %v1014 = vrot.slane %v1009, %v1013
    %v1048 = vunpack.c.l.b16 %v977
    %v1049 = vunpack.c.l.b16 %v978
    %v1050 = vunpack.c.l.b16 %v979
    %v1051 = vunpack.c.l.b16 %v980
    %v1052 = vunpack.c.l.b16 %v981
    %v1053 = vunpack.c.l.b16 %v982
    %v1054 = vunpack.c.l.b16 %v983
    %v1055 = vunpack.c.l.b16 %v984
    %v1056 = vunpack.c.l.b16 %v985
    %v1057 = vunpack.c.l.b16 %v986
    %v1058 = vunpack.c.l.b16 %v987
    %v1059 = vunpack.c.l.b16 %v988
    %v1060 = vunpack.c.l.b16 %v989
    %v1061 = vunpack.c.l.b16 %v990
    %v1062 = vunpack.c.l.b16 %v991
    %v1063 = vunpack.c.l.b16 %v992
    %v1064 = vunpack.c.l.b16 %v993
    %v1065 = vunpack.c.l.b16 %v994
    %v1066 = vunpack.c.l.b16 %v995
    %v1067 = vunpack.c.l.b16 %v996
    %v1068 = vunpack.c.l.b16 %v997
    %v1069 = vunpack.c.l.b16 %v998
    %v1070 = vunpack.c.l.b16 %v999
    %v1071 = vunpack.c.l.b16 %v1000
    %v1072 = vunpack.c.l.b16 %v1001
    %v1073 = vunpack.c.l.b16 %v1002
    %v1074 = vunpack.c.l.b16 %v1003
    %v1075 = vunpack.c.l.b16 %v1004
    %v1076 = vunpack.c.l.b16 %v1005
    %v1077 = vunpack.c.l.b16 %v1006
    %v1078 = vunpack.c.l.b16 %v1007
    %v1079 = vunpack.c.l.b16 %v1008
    %v1080 = vpack.c.b16 %v1049, %v1048
    %v1081 = vpack.c.b16 %v1051, %v1050
    %v1082 = vpack.c.b16 %v1053, %v1052
    %v1083 = vpack.c.b16 %v1055, %v1054
    %v1084 = vpack.c.b16 %v1057, %v1056
    %v1085 = vpack.c.b16 %v1059, %v1058
    %v1086 = vpack.c.b16 %v1061, %v1060
    %v1087 = vpack.c.b16 %v1063, %v1062
    %v1088 = vpack.c.b16 %v1065, %v1064
    %v1089 = vpack.c.b16 %v1067, %v1066
    %v1090 = vpack.c.b16 %v1069, %v1068
    %v1091 = vpack.c.b16 %v1071, %v1070
    %v1092 = vpack.c.b16 %v1073, %v1072
    %v1093 = vpack.c.b16 %v1075, %v1074
    %v1094 = vpack.c.b16 %v1077, %v1076
    %v1095 = vpack.c.b16 %v1079, %v1078
    %1112 = vmatprep.subr.bf16.mxu0 0
    %1113 = vmatpush1.bf16.msra.mxu0 %v1087
    %1114 = vmatprep.subr.bf16.mxu0 0
    %1115 = vmatpush1.bf16.msra.mxu0 %v1086
    %1116 = vmatprep.subr.bf16.mxu0 0
    %1117 = vmatpush1.bf16.msra.mxu0 %v1085
    %1118 = vmatprep.subr.bf16.mxu0 0
    %1119 = vmatpush1.bf16.msra.mxu0 %v1084
    %1120 = vmatprep.subr.bf16.mxu0 0
    %1121 = vmatpush1.bf16.msra.mxu0 %v1083
    %1122 = vmatprep.subr.bf16.mxu0 0
    %1123 = vmatpush1.bf16.msra.mxu0 %v1082
    %1124 = vmatprep.subr.bf16.mxu0 0
    %1125 = vmatpush1.bf16.msra.mxu0 %v1081
    %1126 = vmatprep.subr.bf16.mxu0 0
    %1127 = vmatpush1.bf16.msra.mxu0 %v1080
    %1128 = vmatprep.subr.bf16.mxu0 0
    %1129 = vmatpush2.bf16.msra.mxu0 %v1095
    %1130 = vmatprep.subr.bf16.mxu0 0
    %1131 = vmatpush2.bf16.msra.mxu0 %v1094
    %1132 = vmatprep.subr.bf16.mxu0 0
    %1133 = vmatpush2.bf16.msra.mxu0 %v1093
    %1134 = vmatprep.subr.bf16.mxu0 0
    %1135 = vmatpush2.bf16.msra.mxu0 %v1092
    %1136 = vmatprep.subr.bf16.mxu0 0
    %1137 = vmatpush2.bf16.msra.mxu0 %v1091
    %1138 = vmatprep.subr.bf16.mxu0 0
    %1139 = vmatpush2.bf16.msra.mxu0 %v1090
    %1140 = vmatprep.subr.bf16.mxu0 0
    %1141 = vmatpush2.bf16.msra.mxu0 %v1089
    %1142 = vmatprep.subr.bf16.mxu0 0
    %1143 = vmatpush2.bf16.msra.mxu0 %v1088
    %1144 = vmatprep.mubr.bf16.mxu0 %v976
    %1145 = vmatmul.mubr.bf16.gmra.mxu0 %v975
    %v1146 = vpop.f32.mrf.mxu0
    %v1147 = vadd.f32 %v1014, %v1146
    %v1148 = vpop.f32.mrf.mxu0
    %v1149 = vpop.f32.mrf.mxu0
    %v1150 = vpop.f32.mrf.mxu0
    %1151 = vdwg.mxu0
    %v1152 = vmax.f32 %v1147, 0.0
    %1154 = vrot.lane.b32.xlu0 %v1152, 64
    %v1155 = vpop.permute.xlu0 %1154
    %v1157 = vadd.f32 %v1152, %v1155
    %v1158 = vpack.c.bf16 %v1157, %v1157
    %v1159 = vld [vmem:[%s16] sm:$0xf]
    %v1160 = vld [vmem:[%s16 + $0x4] sm:$0xf]
    %v1161 = vld [vmem:[%s16 + $0x8] sm:$0xf]
    %v1162 = vld [vmem:[%s16 + $0xc] sm:$0xf]
    %v1163 = vld [vmem:[%s16 + $0x10] sm:$0xf]
    %v1164 = vld [vmem:[%s16 + $0x14] sm:$0xf]
    %v1165 = vld [vmem:[%s16 + $0x18] sm:$0xf]
    %v1166 = vld [vmem:[%s16 + $0x1c] sm:$0xf]
    %v1167 = vld [vmem:[%s17] sm:$0x1]
    %v1169 = vlaneseq
    %v1170 = vshrl.u32 %v1169, 7
    %v1171 = vsub.s32 0, %v1170
    %v1172 = vrot.slane %v1167, %v1171
    %v1182 = vunpack.c.l.b16 %v1159
    %v1183 = vunpack.c.l.b16 %v1160
    %v1184 = vunpack.c.l.b16 %v1161
    %v1185 = vunpack.c.l.b16 %v1162
    %v1186 = vunpack.c.l.b16 %v1163
    %v1187 = vunpack.c.l.b16 %v1164
    %v1188 = vunpack.c.l.b16 %v1165
    %v1189 = vunpack.c.l.b16 %v1166
    %v1190 = vpack.c.b16 %v1183, %v1182
    %v1191 = vpack.c.b16 %v1185, %v1184
    %v1192 = vpack.c.b16 %v1187, %v1186
    %v1193 = vpack.c.b16 %v1189, %v1188
    %vm1198 = vcmask 523264
    %v1200 = vsel %vm1198, %v1158, 0
    %1202 = vmatprep.subr.bf16.mxu0 0
    %1203 = vmatpush1.bf16.msra.mxu0 0
    %1204 = vmatprep.subr.bf16.mxu0 0
    %1205 = vmatpush1.bf16.msra.mxu0 0
    %1206 = vmatprep.subr.bf16.mxu0 0
    %1207 = vmatpush1.bf16.msra.mxu0 0
    %1208 = vmatprep.subr.bf16.mxu0 0
    %1209 = vmatpush1.bf16.msra.mxu0 0
    %1210 = vmatprep.subr.bf16.mxu0 0
    %1211 = vmatpush1.bf16.msra.mxu0 %v1193
    %1212 = vmatprep.subr.bf16.mxu0 0
    %1213 = vmatpush1.bf16.msra.mxu0 %v1192
    %1214 = vmatprep.subr.bf16.mxu0 0
    %1215 = vmatpush1.bf16.msra.mxu0 %v1191
    %1216 = vmatprep.subr.bf16.mxu0 0
    %1217 = vmatpush1.bf16.msra.mxu0 %v1190
    %1218 = vmatprep.subr.bf16.mxu0 0
    %1219 = vmatpush2.bf16.msra.mxu0 0
    %1220 = vmatprep.subr.bf16.mxu0 0
    %1221 = vmatpush2.bf16.msra.mxu0 0
    %1222 = vmatprep.subr.bf16.mxu0 0
    %1223 = vmatpush2.bf16.msra.mxu0 0
    %1224 = vmatprep.subr.bf16.mxu0 0
    %1225 = vmatpush2.bf16.msra.mxu0 0
    %1226 = vmatprep.subr.bf16.mxu0 0
    %1227 = vmatpush2.bf16.msra.mxu0 0
    %1228 = vmatprep.subr.bf16.mxu0 0
    %1229 = vmatpush2.bf16.msra.mxu0 0
    %1230 = vmatprep.subr.bf16.mxu0 0
    %1231 = vmatpush2.bf16.msra.mxu0 0
    %1232 = vmatprep.subr.bf16.mxu0 0
    %1233 = vmatpush2.bf16.msra.mxu0 0
    %1234 = vmatprep.mubr.bf16.mxu0 0
    %1235 = vmatmul.mubr.bf16.gmra.mxu0 %v1200
    %v1236 = vpop.f32.mrf.mxu0
    %v1237 = vadd.f32 %v1172, %v1236
    %v1238 = vpop.f32.mrf.mxu0
    %v1239 = vpop.f32.mrf.mxu0
    %v1240 = vpop.f32.mrf.mxu0
    %1241 = vdwg.mxu0
    %vm1242 = vcmask 25600
    %1243 = vst.msk [vmem:[#allocation10] sm:$0x3] %vm1242, %v1237
    // Predicated region
    $region90: #{tpu_custom_call.1} parent=1 // pred_check
      _
    $region91: #{tpu_custom_call.1} parent=1 // pred_check_branch
      %1245 = sbr.rel (0) target = $region93
    $region92: #{tpu_custom_call.1} parent=1 // pred_region
      %s1247 = ssub.s32 32, 32
      %1248 = vsyncadd [#allocation4], %s1247
      %s1250 = sshll.u32 [#allocation10], 4
      %s1251 = int_to_ptr.vmem [resolvable:$true] %s1250
      %1253 = dma.vmem_to_hbm [thread:$0]  %s1251, 32, %s18, [#allocation4]
    $region93: #{tpu_custom_call.1} parent=1 // pred_fallthru
      _
    // Predicated region
    $region94: #{tpu_custom_call.1} parent=1 // pred_check
      _
    $region95: #{tpu_custom_call.1} parent=1 // pred_check_branch
      %1255 = sbr.rel (0) target = $region97
    $region96: #{tpu_custom_call.1} parent=1 // pred_region
      %1256 = dma.done [#allocation4], 32
    $region97: #{tpu_custom_call.1} parent=1 // pred_fallthru
      _
    %1257 = vsyncpa [#allocation3], 1
    %1258 = vsyncpa [#allocation6], 1
    %1259 = vsyncpa [#allocation9], 1
    %1260 = vsyncpa [#allocation4], 1

</llo_original>
